<compile_context>
chip_gen: v6e
topology: v6e:2x2x1
jax: 0.10.0
libtpu: 0.0.40
codegen_flags: <defaults>
</compile_context>

<pallas_src>
import functools

import jax
import jax.numpy as jnp
from jax.experimental import pallas as pl
from jax.experimental.pallas import tpu as pltpu


def _value_kernel(state_ref, w1_ref, w2_ref, w3_ref, b12_ref, b3_ref, out_ref):
    # state_ref: (bb, d_in) float32 — cast to the MXU compute dtype in-kernel
    # (VPU), avoiding a wrapper-side HBM round trip of the batch-scaled input.
    cdt = w1_ref.dtype
    x = state_ref[...].astype(cdt)                       # (bb, d_in)

    # Layer 1, batch-in-lanes: h1^T = W1 @ x^T -> (H, bb).
    # dot_general with both contracting dims last (the attention q @ k^T
    # pattern) keeps batch in lanes without materializing x^T.
    h = jax.lax.dot_general(
        w1_ref[...], x, (((1,), (1,)), ((), ())),
        preferred_element_type=jnp.float32)               # (H, bb) f32
    h = jnp.maximum(h + b12_ref[:, 0:1], 0.0)             # bias/ReLU in f32

    # Layer 2: h2^T = W2 @ h1^T -> (H, bb); lane-dense MXU output (N = bb).
    h = jnp.dot(w2_ref[...], h.astype(cdt),
                preferred_element_type=jnp.float32)
    h = jnp.maximum(h + b12_ref[:, 1:2], 0.0)

    # Layer 3 (N = 1): keep it off the MXU — exact-f32 VPU multiply plus a
    # sublane (hidden-axis) reduction on the XLU.
    v = jnp.sum(h * w3_ref[...], axis=0, keepdims=True)   # (1, bb) f32
    out_ref[...] = v + b3_ref[0, 0]                        # lane-dense store


def _round_up(x, m):
    return ((x + m - 1) // m) * m


@functools.partial(jax.jit, static_argnames=("block_batch",))
def value_forward(state, params, *, block_batch=2048):
    """ValueNetwork forward. state: (batch, d_in) float32 -> (batch, 1) float32."""
    w1, w2, w3, b12, b3 = params
    batch, d_in = state.shape
    hidden = w1.shape[0]

    # Batch tiles live in the lane dimension of the output (1, bb) block, so a
    # tile is either the full batch (block dims == array dims) or a multiple
    # of 128 lanes.  For large batches keep >= 2 grid steps so a v7x chip can
    # shard the "parallel" axis across both TensorCores.
    if batch >= 256:
        bb = min(block_batch, _round_up(pl.cdiv(batch, 2), 128))
        bb = max(bb, 128)
    else:
        bb = batch
    grid = (pl.cdiv(batch, bb),)

    flops = 2 * batch * (d_in * hidden + hidden * hidden + hidden)
    bytes_accessed = (
        state.size * state.dtype.itemsize
        + w1.size * w1.dtype.itemsize
        + w2.size * w2.dtype.itemsize
        + w3.size * w3.dtype.itemsize
        + b12.size * b12.dtype.itemsize
        + b3.size * b3.dtype.itemsize
        + batch * 4)

    out = pl.pallas_call(
        _value_kernel,
        out_shape=jax.ShapeDtypeStruct((1, batch), jnp.float32),
        grid=grid,
        in_specs=[
            pl.BlockSpec((bb, d_in), lambda i: (i, 0)),          # state (f32)
            pl.BlockSpec((hidden, d_in), lambda i: (0, 0)),      # W1 (resident)
            pl.BlockSpec((hidden, hidden), lambda i: (0, 0)),    # W2 (resident)
            pl.BlockSpec((hidden, 1), lambda i: (0, 0)),         # W3 column (f32)
            pl.BlockSpec((hidden, 2), lambda i: (0, 0)),         # b1 | b2 columns
            pl.BlockSpec(memory_space=pltpu.MemorySpace.SMEM),   # b3 scalar
        ],
        out_specs=pl.BlockSpec((1, bb), lambda i: (0, i)),       # lane-dense out
        compiler_params=pltpu.CompilerParams(
            dimension_semantics=("parallel",),
            vmem_limit_bytes=32 * 1024 * 1024),
        cost_estimate=pl.CostEstimate(
            flops=flops, transcendentals=0, bytes_accessed=bytes_accessed),
    )(state, w1, w2, w3, b12, b3)

    # (1, batch) -> (batch, 1): free layout plumbing in the wrapper.
    return out.reshape(batch, 1)


def xavier_uniform(key, fan_in, fan_out, shape, gain=1.0):
    # Matches torch.nn.init.xavier_uniform_: U(-a, a), a = gain*sqrt(6/(fi+fo)).
    bound = gain * (6.0 / (fan_in + fan_out)) ** 0.5
    return jax.random.uniform(key, shape, jnp.float32, minval=-bound, maxval=bound)


def init_value_params(key, num_inputs, hidden_dim):
    """Weights in PyTorch nn.Linear (out, in) layout; W3 stored as a column."""
    k1, k2, k3 = jax.random.split(key, 3)
    w1 = xavier_uniform(k1, num_inputs, hidden_dim, (hidden_dim, num_inputs))
    w2 = xavier_uniform(k2, hidden_dim, hidden_dim, (hidden_dim, hidden_dim))
    w3 = xavier_uniform(k3, hidden_dim, 1, (hidden_dim, 1))
    b12 = jnp.zeros((hidden_dim, 2), jnp.float32)   # col 0: b1, col 1: b2
    b3 = jnp.zeros((1, 1), jnp.float32)
    return (w1, w2, w3, b12, b3)


def prepare_params(params, compute_dtype=jnp.bfloat16):
    """Cast the MXU weights once (not per call). W3 / biases stay f32 (VPU path)."""
    w1, w2, w3, b12, b3 = params
    return (w1.astype(compute_dtype), w2.astype(compute_dtype), w3, b12, b3)


def reference_forward(state, params):
    w1, w2, w3, b12, b3 = params
    with jax.default_matmul_precision("highest"):
        x = jnp.maximum(state @ w1.T + b12[:, 0], 0.0)
        x = jnp.maximum(x @ w2.T + b12[:, 1], 0.0)
        return x @ w3 + b3[0, 0]


if __name__ == "__main__":
    num_inputs = 8
    hidden_dim = 32
    batch = 2

    key = jax.random.PRNGKey(0)
    k_params, k_state = jax.random.split(key, 2)

    params = init_value_params(k_params, num_inputs, hidden_dim)
    state = jax.random.normal(k_state, (batch, num_inputs), jnp.float32)

    ref = reference_forward(state, params)

    # f32-operand path: tolerance covers platform-dependent MXU f32 pass
    # counts; any layout/bias/transpose bug would give O(0.1..1) errors.
    v_f32 = value_forward(state, prepare_params(params, jnp.float32))
    jax.block_until_ready(v_f32)
    assert v_f32.shape == (batch, 1)
    assert jnp.allclose(v_f32, ref, atol=1e-2, rtol=1e-2)

    # bf16 MXU path (default): operands bf16, accumulation f32 -> looser bound.
    v_bf16 = value_forward(state, prepare_params(params, jnp.bfloat16))
    jax.block_until_ready(v_bf16)
    assert v_bf16.shape == (batch, 1)
    assert jnp.allclose(v_bf16, ref, atol=5e-2, rtol=5e-2)

    print("KERNEL_OK")
</pallas_src>

<mosaic_0001>
module attributes {stable_mosaic.version = 11 : i64} {
  func.func @_value_kernel(%arg0: i32, %arg1: memref<2x8xf32, #tpu.memory_space<vmem>>, %arg2: memref<32x8xf32, #tpu.memory_space<vmem>>, %arg3: memref<32x32xf32, #tpu.memory_space<vmem>>, %arg4: memref<32x1xf32, #tpu.memory_space<vmem>>, %arg5: memref<32x2xf32, #tpu.memory_space<vmem>>, %arg6: memref<1x1xf32, #tpu.memory_space<smem>>, %arg7: memref<1x2xf32, #tpu.memory_space<vmem>>) attributes {dimension_semantics = [#tpu.dimension_semantics<parallel>], iteration_bounds = array<i64: 1>, scalar_prefetch = 0 : i64, scratch_operands = 0 : i64, tpu.core_type = #tpu.core_type<tc>, window_params = [{transform_indices = @transform_0, window_bounds = array<i64: 2, 8>}, {pipeline_mode = #tpu.pipeline_mode<synchronous>, transform_indices = @transform_1, window_bounds = array<i64: 32, 8>}, {pipeline_mode = #tpu.pipeline_mode<synchronous>, transform_indices = @transform_2, window_bounds = array<i64: 32, 32>}, {pipeline_mode = #tpu.pipeline_mode<synchronous>, transform_indices = @transform_3, window_bounds = array<i64: 32, 1>}, {pipeline_mode = #tpu.pipeline_mode<synchronous>, transform_indices = @transform_4, window_bounds = array<i64: 32, 2>}, {transform_indices = @transform_5, window_bounds = array<i64: 1, 1>}, {transform_indices = @transform_6, window_bounds = array<i64: 1, 2>}]} {
    %c0 = arith.constant 0 : index
    %c0_0 = arith.constant 0 : index
    %0 = vector.load %arg1[%c0, %c0_0] : memref<2x8xf32, #tpu.memory_space<vmem>>, vector<2x8xf32>
    %c0_1 = arith.constant 0 : index
    %c0_2 = arith.constant 0 : index
    %1 = vector.load %arg2[%c0_1, %c0_2] : memref<32x8xf32, #tpu.memory_space<vmem>>, vector<32x8xf32>
    %cst = arith.constant dense<0.000000e+00> : vector<32x2xf32>
    %2 = tpu.matmul %1, %0, %cst {dimension_numbers = #tpu.dot_dimension_numbers<[1], [1], [0], [0], [0, 0, 1, 0], [], []>} : vector<32x8xf32>, vector<2x8xf32>, vector<32x2xf32> -> vector<32x2xf32>
    %c0_3 = arith.constant 0 : index
    %c0_4 = arith.constant 0 : index
    %3 = vector.load %arg5[%c0_3, %c0_4] : memref<32x2xf32, #tpu.memory_space<vmem>>, vector<32x1xf32>
    %4 = vector.broadcast %3 : vector<32x1xf32> to vector<32x2xf32>
    %5 = arith.addf %2, %4 : vector<32x2xf32>
    %cst_5 = arith.constant 0.000000e+00 : f32
    %6 = vector.broadcast %cst_5 : f32 to vector<32x2xf32>
    %7 = arith.maximumf %5, %6 : vector<32x2xf32>
    %c0_6 = arith.constant 0 : index
    %c0_7 = arith.constant 0 : index
    %8 = vector.load %arg3[%c0_6, %c0_7] : memref<32x32xf32, #tpu.memory_space<vmem>>, vector<32x32xf32>
    %cst_8 = arith.constant dense<0.000000e+00> : vector<32x2xf32>
    %9 = tpu.matmul %8, %7, %cst_8 {dimension_numbers = #tpu.dot_dimension_numbers<[1], [0], [0], [1], [0, 0, 1, 1], [], []>} : vector<32x32xf32>, vector<32x2xf32>, vector<32x2xf32> -> vector<32x2xf32>
    %c0_9 = arith.constant 0 : index
    %c1 = arith.constant 1 : index
    %10 = vector.load %arg5[%c0_9, %c1] : memref<32x2xf32, #tpu.memory_space<vmem>>, vector<32x1xf32>
    %11 = vector.broadcast %10 : vector<32x1xf32> to vector<32x2xf32>
    %12 = arith.addf %9, %11 : vector<32x2xf32>
    %cst_10 = arith.constant 0.000000e+00 : f32
    %13 = vector.broadcast %cst_10 : f32 to vector<32x2xf32>
    %14 = arith.maximumf %12, %13 : vector<32x2xf32>
    %c0_11 = arith.constant 0 : index
    %c0_12 = arith.constant 0 : index
    %15 = vector.load %arg4[%c0_11, %c0_12] : memref<32x1xf32, #tpu.memory_space<vmem>>, vector<32x1xf32>
    %16 = vector.broadcast %15 : vector<32x1xf32> to vector<32x2xf32>
    %17 = arith.mulf %14, %16 : vector<32x2xf32>
    %cst_13 = arith.constant dense<0.000000e+00> : vector<2xf32>
    %18 = vector.multi_reduction <add>, %17, %cst_13 [0] : vector<32x2xf32> to vector<2xf32>
    %19 = vector.shape_cast %18 : vector<2xf32> to vector<1x2xf32>
    %c0_14 = arith.constant 0 : index
    %c0_15 = arith.constant 0 : index
    %20 = memref.load %arg6[%c0_14, %c0_15] : memref<1x1xf32, #tpu.memory_space<smem>>
    %21 = vector.broadcast %20 : f32 to vector<1x2xf32>
    %22 = arith.addf %19, %21 : vector<1x2xf32>
    %c0_16 = arith.constant 0 : index
    %c0_17 = arith.constant 0 : index
    %23 = vector.load %arg7[%c0_16, %c0_17] : memref<1x2xf32, #tpu.memory_space<vmem>>, vector<1x2xf32>
    tpu.vector_store %arg7[%c0_16, %c0_17], %22 {strides = array<i32>} : memref<1x2xf32, #tpu.memory_space<vmem>>, vector<1x2xf32>,
    return
  }
  func.func @transform_0(%arg0: i32) -> (i32, i32) {
    %c0_i32 = arith.constant 0 : i32
    %c0_i32_0 = arith.constant 0 : i32
    return %arg0, %c0_i32 : i32, i32
  }
  func.func @transform_1(%arg0: i32) -> (i32, i32) {
    %c0_i32 = arith.constant 0 : i32
    %c0_i32_0 = arith.constant 0 : i32
    %c0_i32_1 = arith.constant 0 : i32
    return %c0_i32, %c0_i32_0 : i32, i32
  }
  func.func @transform_2(%arg0: i32) -> (i32, i32) {
    %c0_i32 = arith.constant 0 : i32
    %c0_i32_0 = arith.constant 0 : i32
    %c0_i32_1 = arith.constant 0 : i32
    return %c0_i32, %c0_i32_0 : i32, i32
  }
  func.func @transform_3(%arg0: i32) -> (i32, i32) {
    %c0_i32 = arith.constant 0 : i32
    %c0_i32_0 = arith.constant 0 : i32
    %c0_i32_1 = arith.constant 0 : i32
    return %c0_i32, %c0_i32_0 : i32, i32
  }
  func.func @transform_4(%arg0: i32) -> (i32, i32) {
    %c0_i32 = arith.constant 0 : i32
    %c0_i32_0 = arith.constant 0 : i32
    %c0_i32_1 = arith.constant 0 : i32
    return %c0_i32, %c0_i32_0 : i32, i32
  }
  func.func @transform_5(%arg0: i32) -> (i32, i32) {
    %c0_i32 = arith.constant 0 : i32
    %c0_i32_0 = arith.constant 0 : i32
    %c0_i32_1 = arith.constant 0 : i32
    return %c0_i32, %c0_i32_0 : i32, i32
  }
  func.func @transform_6(%arg0: i32) -> (i32, i32) {
    %c0_i32 = arith.constant 0 : i32
    %c0_i32_0 = arith.constant 0 : i32
    return %c0_i32, %arg0 : i32, i32
  }
}

</mosaic_0001>

<llo_original>
// kernel: value_forward.1
$region0: #{value_forward.1}
  #allocation0 [shape = 'u32[]', space=smem, size = 0x4, offset = 0x4, fixed_abs, tag = 'smem constant byte address 0x4 - core index']
  #allocation1 [shape = 'u32[144,128]{1,0:T(1,128)}', space=vmem, size = 0x12000, scoped, tag = 'internal scratch']
  #allocation2 [shape = 'f32[1,1]{1,0:T(1,128)S(6)}', space=smem, size = 0x200, scoped, tag = 'scoped memory for value_forward.1']
  %s0 = inlined_call_operand.vmem [shape: f32[2,8], index: 0, kind: input, shape index: {}]
  %s1 = inlined_call_operand.vmem [shape: f32[32,8], index: 1, kind: input, shape index: {}]
  %s2 = inlined_call_operand.vmem [shape: f32[32,32], index: 2, kind: input, shape index: {}]
  %s3 = inlined_call_operand.vmem [shape: f32[32,1], index: 3, kind: input, shape index: {}]
  %s4 = inlined_call_operand.vmem [shape: f32[32,2], index: 4, kind: input, shape index: {}]
  %s5 = inlined_call_operand.<no memory space> [shape: f32[1,1], index: 5, kind: input, shape index: {}]
  %s6 = inlined_call_operand.hbm [shape: f32[1,2], index: 6, kind: output, shape index: {}]
  %s7 = sld [smem:[#allocation0]]
  $region34: #{value_forward.1} parent=0
    _
  %s9 = ssub.s32 1, %s7
  %s10 = scalar_select 0, %s9, %s7
  %11 = sst [smem:[#allocation2]] %s5
  $region1: #{value_forward.1} parent=0
    #allocation3 [shape = 'u8[512]{0}', space=vmem, size = 0x400, scoped, tag = 'output window, operand 0, single buffered']
    #allocation4 [shape = 's32[1]{0}', space=sflag, size = 0x4, scoped, tag = 'scoped memory for value_forward.1']
    %12 = vsyncpa [#allocation4], 0
    // Predicated region
    $region2: #{value_forward.1} parent=1 // pred_check
      _
    $region3: #{value_forward.1} parent=1 // pred_check_branch
      %14 = sbr.rel (0) target = $region5
    $region4: #{value_forward.1} parent=1 // pred_region
      _
    $region5: #{value_forward.1} parent=1 // pred_fallthru
      _
    // Predicated region
    $region6: #{value_forward.1} parent=1 // pred_check
      _
    $region7: #{value_forward.1} parent=1 // pred_check_branch
      %16 = sbr.rel (0) target = $region9
    $region8: #{value_forward.1} parent=1 // pred_region
      _
    $region9: #{value_forward.1} parent=1 // pred_fallthru
      _
    // Predicated region
    $region10: #{value_forward.1} parent=1 // pred_check
      _
    $region11: #{value_forward.1} parent=1 // pred_check_branch
      %18 = sbr.rel (0) target = $region13
    $region12: #{value_forward.1} parent=1 // pred_region
      _
    $region13: #{value_forward.1} parent=1 // pred_fallthru
      _
    // Predicated region
    $region14: #{value_forward.1} parent=1 // pred_check
      _
    $region15: #{value_forward.1} parent=1 // pred_check_branch
      %20 = sbr.rel (0) target = $region17
    $region16: #{value_forward.1} parent=1 // pred_region
      _
    $region17: #{value_forward.1} parent=1 // pred_fallthru
      _
    // Predicated region
    $region18: #{value_forward.1} parent=1 // pred_check
      _
    $region19: #{value_forward.1} parent=1 // pred_check_branch
      %22 = sbr.rel (0) target = $region21
    $region20: #{value_forward.1} parent=1 // pred_region
      _
    $region21: #{value_forward.1} parent=1 // pred_fallthru
      _
    // Predicated region
    $region22: #{value_forward.1} parent=1 // pred_check
      _
    $region23: #{value_forward.1} parent=1 // pred_check_branch
      %24 = sbr.rel (0) target = $region25
    $region24: #{value_forward.1} parent=1 // pred_region
      _
    $region25: #{value_forward.1} parent=1 // pred_fallthru
      _
    %v25 = vld [vmem:[%s0] sm:$0x3]
    %v26 = vld [vmem:[%s1] sm:$0xff]
    %v27 = vld [vmem:[%s1 + $0x8] sm:$0xff]
    %v28 = vld [vmem:[%s1 + $0x10] sm:$0xff]
    %v29 = vld [vmem:[%s1 + $0x18] sm:$0xff]
    %v30 = vld [vmem:[%s4] sm:$0xff]
    %v31 = vld [vmem:[%s4 + $0x8] sm:$0xff]
    %v32 = vld [vmem:[%s4 + $0x10] sm:$0xff]
    %v33 = vld [vmem:[%s4 + $0x18] sm:$0xff]
    %35 = vset.pattern.permute.xlu0 0
    %36 = vperm.xlu0 %35, %v30
    %v37 = vpop.permute.xlu0 %36
    %40 = vset.pattern.permute.xlu0 0
    %41 = vperm.xlu0 %40, %v31
    %v42 = vpop.permute.xlu0 %41
    %45 = vset.pattern.permute.xlu0 0
    %46 = vperm.xlu0 %45, %v32
    %v47 = vpop.permute.xlu0 %46
    %50 = vset.pattern.permute.xlu0 0
    %51 = vperm.xlu0 %50, %v33
    %v52 = vpop.permute.xlu0 %51
    %vm54 = vcmask 64512
    %v56 = vsel %vm54, %v26, 0
    %v59 = vsel %vm54, %v27, 0
    %v62 = vsel %vm54, %v28, 0
    %v65 = vsel %vm54, %v29, 0
    %v68 = vsel %vm54, %v25, 0
    %70 = vmatprep.subr.mxu0 0.0
    %71 = vmatpush1.xpose.msra.mxu0 0.0
    %72 = vmatprep.subr.mxu0 0.0
    %73 = vmatpush1.xpose.msra.mxu0 0.0
    %74 = vmatprep.subr.mxu0 0.0
    %75 = vmatpush1.xpose.msra.mxu0 0.0
    %76 = vmatprep.subr.mxu0 0.0
    %77 = vmatpush1.xpose.msra.mxu0 0.0
    %78 = vmatprep.subr.mxu0 0.0
    %79 = vmatpush1.xpose.msra.mxu0 0.0
    %80 = vmatprep.subr.mxu0 0.0
    %81 = vmatpush1.xpose.msra.mxu0 0.0
    %82 = vmatprep.subr.mxu0 0.0
    %83 = vmatpush1.xpose.msra.mxu0 0.0
    %84 = vmatprep.subr.mxu0 0.0
    %85 = vmatpush1.xpose.msra.mxu0 0.0
    %86 = vmatprep.subr.mxu0 0.0
    %87 = vmatpush1.xpose.msra.mxu0 0.0
    %88 = vmatprep.subr.mxu0 0.0
    %89 = vmatpush1.xpose.msra.mxu0 0.0
    %90 = vmatprep.subr.mxu0 0.0
    %91 = vmatpush1.xpose.msra.mxu0 0.0
    %92 = vmatprep.subr.mxu0 0.0
    %93 = vmatpush1.xpose.msra.mxu0 0.0
    %94 = vmatprep.subr.mxu0 0.0
    %95 = vmatpush1.xpose.msra.mxu0 0.0
    %96 = vmatprep.subr.mxu0 0.0
    %97 = vmatpush1.xpose.msra.mxu0 0.0
    %98 = vmatprep.subr.mxu0 0.0
    %99 = vmatpush1.xpose.msra.mxu0 0.0
    %100 = vmatprep.subr.mxu0 0.0
    %101 = vmatpush1.xpose.msra.mxu0 %v68
    %102 = vmatprep.subr.mxu0 0.0
    %103 = vmatpush2.xpose.msra.mxu0 0.0
    %104 = vmatprep.subr.mxu0 0.0
    %105 = vmatpush2.xpose.msra.mxu0 0.0
    %106 = vmatprep.subr.mxu0 0.0
    %107 = vmatpush2.xpose.msra.mxu0 0.0
    %108 = vmatprep.subr.mxu0 0.0
    %109 = vmatpush2.xpose.msra.mxu0 0.0
    %110 = vmatprep.subr.mxu0 0.0
    %111 = vmatpush2.xpose.msra.mxu0 0.0
    %112 = vmatprep.subr.mxu0 0.0
    %113 = vmatpush2.xpose.msra.mxu0 0.0
    %114 = vmatprep.subr.mxu0 0.0
    %115 = vmatpush2.xpose.msra.mxu0 0.0
    %116 = vmatprep.subr.mxu0 0.0
    %117 = vmatpush2.xpose.msra.mxu0 0.0
    %118 = vmatprep.subr.mxu0 0.0
    %119 = vmatpush2.xpose.msra.mxu0 0.0
    %120 = vmatprep.subr.mxu0 0.0
    %121 = vmatpush2.xpose.msra.mxu0 0.0
    %122 = vmatprep.subr.mxu0 0.0
    %123 = vmatpush2.xpose.msra.mxu0 0.0
    %124 = vmatprep.subr.mxu0 0.0
    %125 = vmatpush2.xpose.msra.mxu0 0.0
    %126 = vmatprep.subr.mxu0 0.0
    %127 = vmatpush2.xpose.msra.mxu0 0.0
    %128 = vmatprep.subr.mxu0 0.0
    %129 = vmatpush2.xpose.msra.mxu0 0.0
    %130 = vmatprep.subr.mxu0 0.0
    %131 = vmatpush2.xpose.msra.mxu0 0.0
    %132 = vmatprep.subr.mxu0 0.0
    %133 = vmatpush2.xpose.msra.mxu0 0.0
    %134 = vmatprep.mubr.f32.mxu0 0.0
    %135 = vmatmul.mubr.f32.gmra.mxu0 %v56
    %v136 = vpop.f32.mrf.mxu0
    %v137 = vadd.f32 %v37, %v136
    %v138 = vpop.f32.mrf.mxu0
    %139 = vmatprep.mubr.f32.mxu0 0.0
    %140 = vmatmul.mubr.f32.gmra.mxu0 %v59
    %v141 = vpop.f32.mrf.mxu0
    %v142 = vadd.f32 %v42, %v141
    %v143 = vpop.f32.mrf.mxu0
    %144 = vmatprep.mubr.f32.mxu0 0.0
    %145 = vmatmul.mubr.f32.gmra.mxu0 %v62
    %v146 = vpop.f32.mrf.mxu0
    %v147 = vadd.f32 %v47, %v146
    %v148 = vpop.f32.mrf.mxu0
    %149 = vmatprep.mubr.f32.mxu0 0.0
    %150 = vmatmul.mubr.f32.gmra.mxu0 %v65
    %v151 = vpop.f32.mrf.mxu0
    %v152 = vadd.f32 %v52, %v151
    %v153 = vpop.f32.mrf.mxu0
    %154 = vdwg.mxu0
    %v155 = vmax.f32 %v137, 0.0
    %v156 = vmax.f32 %v142, 0.0
    %v157 = vmax.f32 %v147, 0.0
    %v158 = vmax.f32 %v152, 0.0
    %v159 = vld [vmem:[%s2] sm:$0xff]
    %v160 = vld [vmem:[%s2 + $0x8] sm:$0xff]
    %v161 = vld [vmem:[%s2 + $0x10] sm:$0xff]
    %v162 = vld [vmem:[%s2 + $0x18] sm:$0xff]
    %163 = vset.pattern.permute.xlu0 1
    %164 = vperm.xlu0 %163, %v30
    %v165 = vpop.permute.xlu0 %164
    %167 = vset.pattern.permute.xlu0 1
    %168 = vperm.xlu0 %167, %v31
    %v169 = vpop.permute.xlu0 %168
    %171 = vset.pattern.permute.xlu0 1
    %172 = vperm.xlu0 %171, %v32
    %v173 = vpop.permute.xlu0 %172
    %175 = vset.pattern.permute.xlu0 1
    %176 = vperm.xlu0 %175, %v33
    %v177 = vpop.permute.xlu0 %176
    %vm179 = vcmask 261120
    %v181 = vsel %vm179, %v159, 0
    %v184 = vsel %vm179, %v160, 0
    %v187 = vsel %vm179, %v161, 0
    %v190 = vsel %vm179, %v162, 0
    %192 = vmatprep.subr.mxu0 0.0
    %193 = vmatpush1.msra.mxu0 0.0
    %194 = vmatprep.subr.mxu0 0.0
    %195 = vmatpush1.msra.mxu0 0.0
    %196 = vmatprep.subr.mxu0 0.0
    %197 = vmatpush1.msra.mxu0 0.0
    %198 = vmatprep.subr.mxu0 0.0
    %199 = vmatpush1.msra.mxu0 0.0
    %200 = vmatprep.subr.mxu0 0.0
    %201 = vmatpush1.msra.mxu0 0.0
    %202 = vmatprep.subr.mxu0 0.0
    %203 = vmatpush1.msra.mxu0 0.0
    %204 = vmatprep.subr.mxu0 0.0
    %205 = vmatpush1.msra.mxu0 0.0
    %206 = vmatprep.subr.mxu0 0.0
    %207 = vmatpush1.msra.mxu0 0.0
    %208 = vmatprep.subr.mxu0 0.0
    %209 = vmatpush1.msra.mxu0 0.0
    %210 = vmatprep.subr.mxu0 0.0
    %211 = vmatpush1.msra.mxu0 0.0
    %212 = vmatprep.subr.mxu0 0.0
    %213 = vmatpush1.msra.mxu0 0.0
    %214 = vmatprep.subr.mxu0 0.0
    %215 = vmatpush1.msra.mxu0 0.0
    %216 = vmatprep.subr.mxu0 0.0
    %217 = vmatpush1.msra.mxu0 %v158
    %218 = vmatprep.subr.mxu0 0.0
    %219 = vmatpush1.msra.mxu0 %v157
    %220 = vmatprep.subr.mxu0 0.0
    %221 = vmatpush1.msra.mxu0 %v156
    %222 = vmatprep.subr.mxu0 0.0
    %223 = vmatpush1.msra.mxu0 %v155
    %224 = vmatprep.subr.mxu0 0.0
    %225 = vmatpush2.msra.mxu0 0.0
    %226 = vmatprep.subr.mxu0 0.0
    %227 = vmatpush2.msra.mxu0 0.0
    %228 = vmatprep.subr.mxu0 0.0
    %229 = vmatpush2.msra.mxu0 0.0
    %230 = vmatprep.subr.mxu0 0.0
    %231 = vmatpush2.msra.mxu0 0.0
    %232 = vmatprep.subr.mxu0 0.0
    %233 = vmatpush2.msra.mxu0 0.0
    %234 = vmatprep.subr.mxu0 0.0
    %235 = vmatpush2.msra.mxu0 0.0
    %236 = vmatprep.subr.mxu0 0.0
    %237 = vmatpush2.msra.mxu0 0.0
    %238 = vmatprep.subr.mxu0 0.0
    %239 = vmatpush2.msra.mxu0 0.0
    %240 = vmatprep.subr.mxu0 0.0
    %241 = vmatpush2.msra.mxu0 0.0
    %242 = vmatprep.subr.mxu0 0.0
    %243 = vmatpush2.msra.mxu0 0.0
    %244 = vmatprep.subr.mxu0 0.0
    %245 = vmatpush2.msra.mxu0 0.0
    %246 = vmatprep.subr.mxu0 0.0
    %247 = vmatpush2.msra.mxu0 0.0
    %248 = vmatprep.subr.mxu0 0.0
    %249 = vmatpush2.msra.mxu0 0.0
    %250 = vmatprep.subr.mxu0 0.0
    %251 = vmatpush2.msra.mxu0 0.0
    %252 = vmatprep.subr.mxu0 0.0
    %253 = vmatpush2.msra.mxu0 0.0
    %254 = vmatprep.subr.mxu0 0.0
    %255 = vmatpush2.msra.mxu0 0.0
    %256 = vmatprep.mubr.f32.mxu0 0.0
    %257 = vmatmul.mubr.f32.gmra.mxu0 %v181
    %v258 = vpop.f32.mrf.mxu0
    %v259 = vadd.f32 %v165, %v258
    %v260 = vpop.f32.mrf.mxu0
    %261 = vmatprep.mubr.f32.mxu0 0.0
    %262 = vmatmul.mubr.f32.gmra.mxu0 %v184
    %v263 = vpop.f32.mrf.mxu0
    %v264 = vadd.f32 %v169, %v263
    %v265 = vpop.f32.mrf.mxu0
    %266 = vmatprep.mubr.f32.mxu0 0.0
    %267 = vmatmul.mubr.f32.gmra.mxu0 %v187
    %v268 = vpop.f32.mrf.mxu0
    %v269 = vadd.f32 %v173, %v268
    %v270 = vpop.f32.mrf.mxu0
    %271 = vmatprep.mubr.f32.mxu0 0.0
    %272 = vmatmul.mubr.f32.gmra.mxu0 %v190
    %v273 = vpop.f32.mrf.mxu0
    %v274 = vadd.f32 %v177, %v273
    %v275 = vpop.f32.mrf.mxu0
    %276 = vdwg.mxu0
    %v277 = vmax.f32 %v259, 0.0
    %v278 = vmax.f32 %v264, 0.0
    %v279 = vmax.f32 %v269, 0.0
    %v280 = vmax.f32 %v274, 0.0
    %v281 = vld [vmem:[%s3] sm:$0xff]
    %v282 = vld [vmem:[%s3 + $0x8] sm:$0xff]
    %v283 = vld [vmem:[%s3 + $0x10] sm:$0xff]
    %v284 = vld [vmem:[%s3 + $0x18] sm:$0xff]
    %286 = vset.pattern.permute.xlu0 0
    %287 = vperm.xlu0 %286, %v281
    %v288 = vpop.permute.xlu0 %287
    %291 = vset.pattern.permute.xlu0 0
    %292 = vperm.xlu0 %291, %v282
    %v293 = vpop.permute.xlu0 %292
    %296 = vset.pattern.permute.xlu0 0
    %297 = vperm.xlu0 %296, %v283
    %v298 = vpop.permute.xlu0 %297
    %301 = vset.pattern.permute.xlu0 0
    %302 = vperm.xlu0 %301, %v284
    %v303 = vpop.permute.xlu0 %302
    %v305 = vmul.f32 %v277, %v288
    %v306 = vmul.f32 %v278, %v293
    %v307 = vmul.f32 %v279, %v298
    %v308 = vmul.f32 %v280, %v303
    %vm309 = vcmask 15360
    %v310 = vsel %vm309, %v305, 0.0
    %v311 = vsel %vm309, %v306, 0.0
    %v312 = vadd.f32 %v310, %v311
    %v313 = vsel %vm309, %v307, 0.0
    %v314 = vadd.f32 %v312, %v313
    %v315 = vsel %vm309, %v308, 0.0
    %v316 = vadd.f32 %v314, %v315
    %v317 = vrot.slane %v316, 4
    %v318 = vadd.f32 %v316, %v317
    %v319 = vrot.slane %v318, 2
    %v320 = vadd.f32 %v318, %v319
    %v321 = vrot.slane %v320, 1
    %v322 = vadd.f32 %v320, %v321
    %s323 = sld [smem:[#allocation2]]
    %v324 = vstv %s323
    %v325 = vadd.f32 %v322, %v324
    %vm326 = vcmask 8192
    %327 = vst.msk [vmem:[#allocation3] sm:$0x1] %vm326, %v325
    // Predicated region
    $region26: #{value_forward.1} parent=1 // pred_check
      _
    $region27: #{value_forward.1} parent=1 // pred_check_branch
      %329 = sbr.rel (0) target = $region29
    $region28: #{value_forward.1} parent=1 // pred_region
      %s331 = ssub.s32 16, 16
      %332 = vsyncadd [#allocation4], %s331
      %s334 = sshll.u32 [#allocation3], 4
      %s335 = int_to_ptr.vmem [resolvable:$true] %s334
      %337 = dma.vmem_to_hbm [thread:$0]  %s335, 16, %s6, [#allocation4]
    $region29: #{value_forward.1} parent=1 // pred_fallthru
      _
    // Predicated region
    $region30: #{value_forward.1} parent=1 // pred_check
      _
    $region31: #{value_forward.1} parent=1 // pred_check_branch
      %339 = sbr.rel (0) target = $region33
    $region32: #{value_forward.1} parent=1 // pred_region
      %340 = dma.done [#allocation4], 16
    $region33: #{value_forward.1} parent=1 // pred_fallthru
      _
    %341 = vsyncpa [#allocation4], 1

</llo_original>
